<compile_context>
chip_gen: v7x
topology: tpu7x:2x2x1
jax: 0.10.0
libtpu: 0.0.40
codegen_flags: <defaults>
</compile_context>

<pallas_src>
import jax
import jax.numpy as jnp
from jax.experimental import pallas as pl
from jax.experimental.pallas import tpu as pltpu


def _query_vmem_limit():
    cap = 64 * 1024 * 1024
    try:
        info = pltpu.get_tpu_info()
        cap = int(getattr(info, "vmem_capacity_bytes", cap))
    except Exception:
        pass
    # ~75% of physical VMEM: ~96 MiB on v5e/v6e (128 MiB parts), ~48 MiB on v7x.
    return int(max(32 * 1024 * 1024, min(cap * 3 // 4, 96 * 1024 * 1024)))


_VMEM_LIMIT = _query_vmem_limit()


# ----------------------------------------------------------------------------
# Pallas kernels
# ----------------------------------------------------------------------------

def _dynconv_kernel(patch_ref, w_ref, out_ref):
    # One bf16 MXU matmul per (batch, M-tile), f32 accumulation, bf16 store.
    out_ref[0] = jnp.dot(
        patch_ref[0], w_ref[0],
        preferred_element_type=jnp.float32).astype(out_ref.dtype)


def dynconv_matmul(patches, w_mix):
    """patches (B, M, P) bf16, w_mix (B, P, N) bf16 -> (B, M, N) bf16.

    w_mix[b] = sum_k attn[b,k] * W_k was premixed outside (algebraic
    reassociation of the PyTorch per-expert conv sum), so the kernel is a pure
    per-sample matmul: MXU/DMA bound, no VPU premix on the critical path.
    """
    B, M, P = patches.shape
    _, _, N = w_mix.shape

    # M tiling: 256-row tiles (amortizes per-step overhead, fills the 256-row
    # MXU on v6e; still comfortably inside v7x's 64 MiB VMEM), else full M.
    if M > 256:
        tile_m = 256
        m_pad = pl.cdiv(M, tile_m) * tile_m
        if m_pad != M:
            patches = jnp.pad(patches, ((0, 0), (0, m_pad - M), (0, 0)))
    else:
        tile_m, m_pad = M, M

    out = pl.pallas_call(
        _dynconv_kernel,
        out_shape=jax.ShapeDtypeStruct((B, m_pad, N), jnp.bfloat16),
        grid=(B, m_pad // tile_m),
        in_specs=[
            pl.BlockSpec((1, tile_m, P), lambda b, m: (b, m, 0)),   # patches tile
            pl.BlockSpec((1, P, N), lambda b, m: (b, 0, 0)),        # premixed weights
        ],
        out_specs=pl.BlockSpec((1, tile_m, N), lambda b, m: (b, m, 0)),
        compiler_params=pltpu.CompilerParams(
            dimension_semantics=("parallel", "parallel"),
            vmem_limit_bytes=_VMEM_LIMIT),
    )(patches, w_mix)
    return out[:, :M] if m_pad != M else out


def _bn_stats_kernel(x_ref, sum_ref, sq_ref):
    # Per-channel sum / sum-of-squares, accumulated over the M (last, arbitrary)
    # grid axis into the resident output block.
    @pl.when(pl.program_id(1) == 0)
    def _():
        sum_ref[...] = jnp.zeros_like(sum_ref)
        sq_ref[...] = jnp.zeros_like(sq_ref)
    x = x_ref[...].astype(jnp.float32)
    sum_ref[...] += jnp.sum(x, axis=0, keepdims=True)
    sq_ref[...] += jnp.sum(x * x, axis=0, keepdims=True)


def _make_bn_apply_kernel(use_res, use_relu):
    def kernel(x_ref, scale_ref, shift_ref, *rest):
        if use_res:
            res_ref, o_ref = rest
        else:
            (o_ref,) = rest
        y = x_ref[...].astype(jnp.float32) * scale_ref[...] + shift_ref[...]
        if use_res:
            y = y + res_ref[...].astype(jnp.float32)
        if use_relu:
            y = jnp.maximum(y, 0.0)
        o_ref[...] = y.astype(o_ref.dtype)
    return kernel


def _pick_tile(n, cands):
    for t in cands:
        if n % t == 0:
            return t
    return n


def pallas_batchnorm(x, gamma, beta, residual=None, relu=False, eps=1e-5):
    """Training-mode BatchNorm2d (stats over N,H,W) + residual + ReLU, fused.

    Two M-tiled Pallas passes (bounded VMEM on v7x at any batch size):
      1) per-channel sum / sum-of-squares reduction (M axis "arbitrary"),
      2) fused scale/shift (+residual, +ReLU), bf16 lane-dense output.
    C=64 layers are folded (M,64)->(M/2,128) so stores stay lane-dense.
    gamma/beta are pre-reshaped to (1, C) f32.
    """
    B, H, W, C = x.shape
    M = B * H * W
    xf = x.reshape(M, C)
    rf = residual.reshape(M, C) if residual is not None else None

    # Lane-dense folding for narrow channel counts (stem / layer1, C=64).
    r = 1
    if C < 128 and 128 % C == 0 and M % (128 // C) == 0:
        r = 128 // C
    Mv, Cv = M // r, C * r
    xv = xf.reshape(Mv, Cv)
    rv = rf.reshape(Mv, Cv) if rf is not None else None

    tile_c = _pick_tile(Cv, (128,))
    tile_m = _pick_tile(Mv, (512, 256, 128, 64, 32, 16, 8))
    grid = (Cv // tile_c, Mv // tile_m)

    sums, sqs = pl.pallas_call(
        _bn_stats_kernel,
        out_shape=(jax.ShapeDtypeStruct((1, Cv), jnp.float32),
                   jax.ShapeDtypeStruct((1, Cv), jnp.float32)),
        grid=grid,
        in_specs=[pl.BlockSpec((tile_m, tile_c), lambda c, m: (m, c))],
        out_specs=(pl.BlockSpec((1, tile_c), lambda c, m: (0, c)),
                   pl.BlockSpec((1, tile_c), lambda c, m: (0, c))),
        compiler_params=pltpu.CompilerParams(
            dimension_semantics=("parallel", "arbitrary"),
            vmem_limit_bytes=_VMEM_LIMIT),
    )(xv)

    # Tiny O(C) per-channel scalar math: fold lane-replicated columns and build
    # the affine scale/shift once (not worth a Pallas launch).
    if r > 1:
        sums = sums.reshape(r, C).sum(axis=0, keepdims=True)
        sqs = sqs.reshape(r, C).sum(axis=0, keepdims=True)
    mean = sums / M
    var = jnp.maximum(sqs / M - mean * mean, 0.0)
    scale = gamma * jax.lax.rsqrt(var + eps)
    shift = beta - mean * scale
    if r > 1:
        scale = jnp.tile(scale, (1, r))
        shift = jnp.tile(shift, (1, r))

    args = [xv, scale, shift]
    in_specs = [pl.BlockSpec((tile_m, tile_c), lambda c, m: (m, c)),
                pl.BlockSpec((1, tile_c), lambda c, m: (0, c)),
                pl.BlockSpec((1, tile_c), lambda c, m: (0, c))]
    if rv is not None:
        args.append(rv)
        in_specs.append(pl.BlockSpec((tile_m, tile_c), lambda c, m: (m, c)))

    y = pl.pallas_call(
        _make_bn_apply_kernel(rv is not None, relu),
        out_shape=jax.ShapeDtypeStruct((Mv, Cv), jnp.bfloat16),
        grid=grid,
        in_specs=in_specs,
        out_specs=pl.BlockSpec((tile_m, tile_c), lambda c, m: (m, c)),
        compiler_params=pltpu.CompilerParams(
            dimension_semantics=("parallel", "parallel"),
            vmem_limit_bytes=_VMEM_LIMIT),
    )(*args)
    return y.reshape(B, H, W, C)


def _linear_kernel(x_ref, w_ref, b_ref, o_ref):
    y = jnp.dot(x_ref[...], w_ref[...], preferred_element_type=jnp.float32)
    o_ref[...] = (y + b_ref[...]).astype(o_ref.dtype)


def pallas_linear(x, w, bias):
    """(M, K) @ (K, Npad) + bias; Npad is 128-padded for lane-dense stores."""
    M, K = x.shape
    _, N = w.shape
    return pl.pallas_call(
        _linear_kernel,
        out_shape=jax.ShapeDtypeStruct((M, N), jnp.float32),
        grid=(1,),
        in_specs=[pl.BlockSpec((M, K), lambda i: (0, 0)),
                  pl.BlockSpec((K, N), lambda i: (0, 0)),
                  pl.BlockSpec((1, N), lambda i: (0, 0))],
        out_specs=pl.BlockSpec((M, N), lambda i: (0, 0)),
        compiler_params=pltpu.CompilerParams(vmem_limit_bytes=_VMEM_LIMIT),
    )(x, w, bias)


# ----------------------------------------------------------------------------
# JAX glue (tiny ops / data movement only)
# ----------------------------------------------------------------------------

def im2col(x, kh, kw, stride, padding):
    """x: (B, H, W, C) bf16 -> patches (B, Ho*Wo, kh*kw*C), Ho, Wo."""
    B, H, W, C = x.shape
    if padding:
        x = jnp.pad(x, ((0, 0), (padding, padding), (padding, padding), (0, 0)))
    Ho = (H + 2 * padding - kh) // stride + 1
    Wo = (W + 2 * padding - kw) // stride + 1
    cols = []
    for i in range(kh):
        for j in range(kw):
            cols.append(x[:, i:i + stride * Ho:stride, j:j + stride * Wo:stride, :])
    patches = jnp.stack(cols, axis=3)                      # (B, Ho, Wo, kh*kw, C)
    return patches.reshape(B, Ho * Wo, kh * kw * C), Ho, Wo


def maxpool2(x):
    """MaxPool2d(2) on NHWC."""
    B, H, W, C = x.shape
    return jnp.max(x.reshape(B, H // 2, 2, W // 2, 2, C), axis=(2, 4))


# ----------------------------------------------------------------------------
# Module forward passes
# ----------------------------------------------------------------------------

def dynamic_conv2d(x, p, stride, padding, temperature):
    """DynamicConv2d.forward. x: (B, H, W, C) NHWC, bf16."""
    B, H, W, C = x.shape
    max_c = p['max_in_channels']
    if C < max_c:                                     # torch.cat with zero padding
        x = jnp.pad(x, ((0, 0), (0, 0), (0, 0), (0, max_c - C)))

    # Attention branch: AdaptiveAvgPool2d(1) -> 1x1 conv -> ReLU -> 1x1 conv.
    # M = batch size, launch-overhead-dominated -> plain XLA (f32).
    pooled = jnp.mean(x, axis=(1, 2), dtype=jnp.float32)              # (B, Cin)
    h = jnp.maximum(pooled @ p['attn_w1'], 0.0)                       # (B, Cmid)
    logits = h @ p['attn_w2']                                         # (B, K)
    attn = jax.nn.softmax(logits / temperature, axis=1)               # (B, K) f32

    # Per-sample weight premix in XLA (off the kernel's critical path; for
    # small B this costs only B*P*N bf16 bytes of HBM):
    #   out[b] = patches[b] @ (sum_k attn[b,k] * W_k)
    w_mix = jnp.einsum('bk,kpn->bpn', attn,
                       p['w_mat'].astype(jnp.float32)).astype(jnp.bfloat16)

    kh = kw = p['ksize']
    # TODO(synk): build patches inside the kernel from an NHWC VMEM tile
    # (shifted reads / 9 offset matmuls) to avoid materializing the 9x-inflated
    # im2col tensor in HBM — it is the dominant remaining DMA traffic.
    patches, Ho, Wo = im2col(x, kh, kw, stride, padding)              # bf16
    out = dynconv_matmul(patches, w_mix)                              # (B, M, Cout) bf16
    return out.reshape(B, Ho, Wo, -1)


def dyn_res_block(x, p, temperature):
    """DynamicResBlock.forward."""
    stride = p['stride']
    out = dynamic_conv2d(x, p['conv1'], stride, 1, temperature)
    out = pallas_batchnorm(out, p['bn1'][0], p['bn1'][1], relu=True)
    out = dynamic_conv2d(out, p['conv2'], 1, 1, temperature)
    if 'shortcut_conv' in p:
        sc = dynamic_conv2d(x, p['shortcut_conv'], stride, 0, temperature)
        sc = pallas_batchnorm(sc, p['shortcut_bn'][0], p['shortcut_bn'][1])
    else:
        sc = x
    # bn2(out) + shortcut, then ReLU — fused in one Pallas pass.
    return pallas_batchnorm(out, p['bn2'][0], p['bn2'][1], residual=sc, relu=True)


def dynamic_resnet12_forward(x_nchw, params, temperature=30.0):
    """DynamicResNet12.forward. Input is PyTorch-style NCHW."""
    # NCHW -> NHWC; activations stay bf16 end-to-end (stats/accum in f32).
    x = jnp.transpose(x_nchw, (0, 2, 3, 1)).astype(jnp.bfloat16)
    # stem: DynamicConv2d(3,64,3,s1,p1) -> BN -> ReLU -> MaxPool2d(2)
    x = dynamic_conv2d(x, params['stem'], 1, 1, temperature)
    x = pallas_batchnorm(x, params['stem_bn'][0], params['stem_bn'][1], relu=True)
    x = maxpool2(x)
    for layer in params['layers']:
        for blk in layer:
            x = dyn_res_block(x, blk, temperature)
    pooled = jnp.mean(x, axis=(1, 2), dtype=jnp.float32)              # AdaptiveAvgPool2d(1)
    logits = pallas_linear(pooled, params['fc_w'], params['fc_b'])    # (B, 128) padded
    return logits[:, :params['num_classes']]


# ----------------------------------------------------------------------------
# Deterministic parameter initialization (shapes from the PyTorch __init__).
# Parameters are stored pre-transposed / pre-reshaped / pre-cast.
# ----------------------------------------------------------------------------

def _init_dynconv(key, max_in, out_ch, ksize, kmix):
    k1, k2, k3 = jax.random.split(key, 3)
    fan_in = max_in * ksize * ksize
    w = jax.random.normal(k1, (kmix, out_ch, max_in, ksize, ksize), jnp.float32)
    w = w / jnp.sqrt(float(fan_in))
    # (K, Cout, Cin, kh, kw) -> (K, kh*kw*Cin, Cout): matches im2col patch order.
    w_mat = jnp.transpose(w, (0, 3, 4, 2, 1)).reshape(
        kmix, ksize * ksize * max_in, out_ch).astype(jnp.bfloat16)
    cmid = max(max_in // 4, 1)
    attn_w1 = (jax.random.normal(k2, (cmid, max_in), jnp.float32)
               / jnp.sqrt(float(max_in))).T                    # stored (Cin, Cmid)
    attn_w2 = (jax.random.normal(k3, (kmix, cmid), jnp.float32)
               / jnp.sqrt(float(cmid))).T                      # stored (Cmid, K)
    return dict(w_mat=w_mat, attn_w1=attn_w1, attn_w2=attn_w2,
                max_in_channels=max_in, ksize=ksize)


def _init_bn(ch):
    # PyTorch BatchNorm2d default init: gamma=1, beta=0; stored as (1, C).
    return (jnp.ones((1, ch), jnp.float32), jnp.zeros((1, ch), jnp.float32))


def make_params(key, num_classes=10, kmix=4):
    nk = iter(jax.random.split(key, 64))
    params = {
        'stem': _init_dynconv(next(nk), 3, 64, 3, kmix),
        'stem_bn': _init_bn(64),
    }
    layers = []
    in_ch = 64
    for out_ch in (64, 128, 256):
        blocks = []
        for bi in range(3):
            stride = 2 if bi == 0 else 1
            blk = {
                'stride': stride,
                'conv1': _init_dynconv(next(nk), in_ch, out_ch, 3, kmix),
                'bn1': _init_bn(out_ch),
                'conv2': _init_dynconv(next(nk), out_ch, out_ch, 3, kmix),
                'bn2': _init_bn(out_ch),
            }
            if stride != 1 or in_ch != out_ch:
                blk['shortcut_conv'] = _init_dynconv(next(nk), in_ch, out_ch, 1, kmix)
                blk['shortcut_bn'] = _init_bn(out_ch)
            blocks.append(blk)
            in_ch = out_ch
        layers.append(blocks)
    params['layers'] = layers
    # Final FC: stored (256, Npad) with Npad a multiple of 128 (lane-dense store).
    n_pad = -(-num_classes // 128) * 128
    fc_w = (jax.random.normal(next(nk), (num_classes, 256), jnp.float32)
            / jnp.sqrt(256.0)).T                               # (256, num_classes)
    params['fc_w'] = jnp.pad(fc_w, ((0, 0), (0, n_pad - num_classes)))
    params['fc_b'] = jnp.zeros((1, n_pad), jnp.float32)
    params['num_classes'] = num_classes
    return params


# ----------------------------------------------------------------------------
# Main
# ----------------------------------------------------------------------------

if __name__ == "__main__":
    key = jax.random.PRNGKey(0)
    pkey, xkey = jax.random.split(key)
    params = make_params(pkey, num_classes=10, kmix=4)
    # PyTorch-style NCHW input: batch=2, channels=3, 16x16 spatial.
    x = jax.random.normal(xkey, (2, 3, 16, 16), jnp.float32)
    logits = dynamic_resnet12_forward(x, params, temperature=30.0)
    jax.block_until_ready(logits)
    assert logits.shape == (2, 10), logits.shape
    print("KERNEL_OK")
</pallas_src>

<mosaic_0001>
module attributes {stable_mosaic.version = 11 : i64} {
  func.func @_dynconv_kernel(%arg0: i32, %arg1: i32, %arg2: memref<1x256x27xbf16, #tpu.memory_space<vmem>>, %arg3: memref<1x27x64xbf16, #tpu.memory_space<vmem>>, %arg4: memref<1x256x64xbf16, #tpu.memory_space<vmem>>) attributes {dimension_semantics = [#tpu.dimension_semantics<parallel>, #tpu.dimension_semantics<parallel>], iteration_bounds = array<i64: 2, 1>, scalar_prefetch = 0 : i64, scratch_operands = 0 : i64, tpu.core_type = #tpu.core_type<tc>, window_params = [{transform_indices = @transform_0, window_bounds = array<i64: 1, 256, 27>}, {transform_indices = @transform_1, window_bounds = array<i64: 1, 27, 64>}, {transform_indices = @transform_2, window_bounds = array<i64: 1, 256, 64>}]} {
    %c0 = arith.constant 0 : index
    %c0_0 = arith.constant 0 : index
    %c0_1 = arith.constant 0 : index
    %0 = vector.load %arg2[%c0, %c0_0, %c0_1] : memref<1x256x27xbf16, #tpu.memory_space<vmem>>, vector<1x256x27xbf16>
    %1 = vector.shape_cast %0 : vector<1x256x27xbf16> to vector<256x27xbf16>
    %c0_2 = arith.constant 0 : index
    %c0_3 = arith.constant 0 : index
    %c0_4 = arith.constant 0 : index
    %2 = vector.load %arg3[%c0_2, %c0_3, %c0_4] : memref<1x27x64xbf16, #tpu.memory_space<vmem>>, vector<1x27x64xbf16>
    %3 = vector.shape_cast %2 : vector<1x27x64xbf16> to vector<27x64xbf16>
    %cst = arith.constant dense<0.000000e+00> : vector<256x64xf32>
    %4 = tpu.matmul %1, %3, %cst {dimension_numbers = #tpu.dot_dimension_numbers<[1], [0], [0], [1], [0, 0, 1, 1], [], []>} : vector<256x27xbf16>, vector<27x64xbf16>, vector<256x64xf32> -> vector<256x64xf32>
    %5 = arith.truncf %4 : vector<256x64xf32> to vector<256x64xbf16>
    %c0_5 = arith.constant 0 : index
    %c0_6 = arith.constant 0 : index
    %c0_7 = arith.constant 0 : index
    %6 = vector.load %arg4[%c0_5, %c0_6, %c0_7] : memref<1x256x64xbf16, #tpu.memory_space<vmem>>, vector<1x256x64xbf16>
    %7 = vector.shape_cast %6 : vector<1x256x64xbf16> to vector<256x64xbf16>
    %8 = vector.shape_cast %5 : vector<256x64xbf16> to vector<1x256x64xbf16>
    tpu.vector_store %arg4[%c0_5, %c0_6, %c0_7], %8 {strides = array<i32>} : memref<1x256x64xbf16, #tpu.memory_space<vmem>>, vector<1x256x64xbf16>,
    return
  }
  func.func @transform_0(%arg0: i32, %arg1: i32) -> (i32, i32, i32) {
    %c0_i32 = arith.constant 0 : i32
    %c0_i32_0 = arith.constant 0 : i32
    return %arg0, %arg1, %c0_i32 : i32, i32, i32
  }
  func.func @transform_1(%arg0: i32, %arg1: i32) -> (i32, i32, i32) {
    %c0_i32 = arith.constant 0 : i32
    %c0_i32_0 = arith.constant 0 : i32
    %c0_i32_1 = arith.constant 0 : i32
    return %arg0, %c0_i32, %c0_i32_0 : i32, i32, i32
  }
  func.func @transform_2(%arg0: i32, %arg1: i32) -> (i32, i32, i32) {
    %c0_i32 = arith.constant 0 : i32
    %c0_i32_0 = arith.constant 0 : i32
    return %arg0, %arg1, %c0_i32 : i32, i32, i32
  }
}

</mosaic_0001>

<llo_original>
// kernel: tpu_custom_call.1
$region0: #{tpu_custom_call.1}
  #allocation0 [shape = 'u32[]', space=smem, size = 0x4, offset = 0x4, fixed_abs, tag = 'smem constant byte address 0x4 - core index']
  #allocation1 [shape = 'u32[144,128]{1,0:T(1,128)}', space=vmem, size = 0x12000, scoped, tag = 'internal scratch']
  %s0 = inlined_call_operand.vmem [shape: bf16[2,256,27], index: 0, kind: input, shape index: {}]
  %s1 = inlined_call_operand.vmem [shape: bf16[2,27,64], index: 1, kind: input, shape index: {}]
  %s2 = inlined_call_operand.vmem [shape: bf16[2,256,64], index: 2, kind: output, shape index: {}]
  %s3 = sld [smem:[#allocation0]]
  $region41: #{tpu_custom_call.1} parent=0
    _
  %s5 = ssub.s32 1, %s3
  %s6 = scalar_select 0, %s5, %s3
  loop: start=0, step=1, limit=4
  $region2: #{tpu_custom_call.1} parent=0 // loop_pre_header
    _
  $region3: #{tpu_custom_call.1} parent=0 // loop_header
    %s8 = sphi 0, %s12
    %p9 = scmp.ge.s32.totalorder %s8, 4
    %s15 = sphi 0, %s27
    %s16 = sphi 0, %s23
    %s17 = sphi 0, %s15
    %s18 = sphi 0, %s16
    %s19 = sphi 0, %s17
    %s20 = sphi 0, %s18
    %s32 = sphi 0, %s34
    %s35 = sphi 0, %s32
    %s36 = sphi 0, %s35
    %s52 = sphi 0, %s36
    %s58 = sphi 0, %s60
    %s61 = sphi 0, %s58
    %s62 = sphi 0, %s61
    %s78 = sphi 0, %s62
    %s86 = sphi 0, %s88
    %s89 = sphi 0, %s86
    %s90 = sphi 0, %s89
    %s106 = sphi 0, %s90
  $region4: #{tpu_custom_call.1} parent=0 // loop_header_branch
    %11 = sbr.rel (%p9) target = $region8
  $region5: #{tpu_custom_call.1} parent=0 // loop_body
    %s13 = ssub.s32 %s8, 1
    %s14 = ssub.s32 %s8, 2
    %s21 = sadd.s32 1, %s16
    %p22 = scmp.ge.s32.totalorder %s21, 1
    %s23 = scalar_select %p22, 0, %s21
    %s24 = sadd.s32 1, %s15
    %s25 = scalar_select %p22, %s24, %s15
    %p26 = scmp.ge.s32.totalorder %s25, 2
    %s27 = scalar_select %p26, 0, %s25
    %s28 = ssub.s32 %s15, %s27
    %s29 = ssub.s32 %s16, %s23
    %s30 = sor.u32 %s28, %s29
    %p31 = scmp.eq.s32.totalorder %s30, 0
    %s33 = sadd.s32 %s32, 1
    %s34 = scalar_select %p31, %s32, %s33
    %p37 = pneg %p31
    %p38 = scmp.eq.s32.totalorder %s8, 1
    %p39 = por %p37, %p38
    %p40 = scmp.ne.s32.totalorder %s32, %s35
    %p41 = scmp.eq.s32.totalorder %s8, 0
    %p42 = por %p40, %p41
    %p43 = scmp.ne.s32.totalorder %s32, %s35
    %p44 = scmp.eq.s32.totalorder %s13, 1
    %p45 = por %p43, %p44
    %p46 = scmp.ne.s32.totalorder %s35, %s36
    %p47 = scmp.eq.s32.totalorder %s13, 0
    %p48 = por %p46, %p47
    %p49 = scmp.ne.s32.totalorder %s35, %s36
    %p50 = scmp.eq.s32.totalorder %s14, 1
    %p51 = por %p49, %p50
    %p53 = scmp.ne.s32.totalorder %s36, %s52
    %p54 = scmp.eq.s32.totalorder %s14, 0
    %p55 = por %p53, %p54
    %s56 = ssub.s32 %s15, %s27
    %p57 = scmp.eq.s32.totalorder %s56, 0
    %s59 = sadd.s32 %s58, 1
    %s60 = scalar_select %p57, %s58, %s59
    %p63 = pneg %p57
    %p64 = scmp.eq.s32.totalorder %s8, 1
    %p65 = por %p63, %p64
    %p66 = scmp.ne.s32.totalorder %s58, %s61
    %p67 = scmp.eq.s32.totalorder %s8, 0
    %p68 = por %p66, %p67
    %p69 = scmp.ne.s32.totalorder %s58, %s61
    %p70 = scmp.eq.s32.totalorder %s13, 1
    %p71 = por %p69, %p70
    %p72 = scmp.ne.s32.totalorder %s61, %s62
    %p73 = scmp.eq.s32.totalorder %s13, 0
    %p74 = por %p72, %p73
    %p75 = scmp.ne.s32.totalorder %s61, %s62
    %p76 = scmp.eq.s32.totalorder %s14, 1
    %p77 = por %p75, %p76
    %p79 = scmp.ne.s32.totalorder %s62, %s78
    %p80 = scmp.eq.s32.totalorder %s14, 0
    %p81 = por %p79, %p80
    %s82 = ssub.s32 %s15, %s27
    %s83 = ssub.s32 %s16, %s23
    %s84 = sor.u32 %s82, %s83
    %p85 = scmp.eq.s32.totalorder %s84, 0
    %s87 = sadd.s32 %s86, 1
    %s88 = scalar_select %p85, %s86, %s87
    %p91 = pneg %p85
    %p92 = scmp.eq.s32.totalorder %s8, 1
    %p93 = por %p91, %p92
    %p94 = scmp.ne.s32.totalorder %s86, %s89
    %p95 = scmp.eq.s32.totalorder %s8, 0
    %p96 = por %p94, %p95
    %p97 = scmp.ne.s32.totalorder %s86, %s89
    %p98 = scmp.eq.s32.totalorder %s13, 1
    %p99 = por %p97, %p98
    %p100 = scmp.ne.s32.totalorder %s89, %s90
    %p101 = scmp.eq.s32.totalorder %s13, 0
    %p102 = por %p100, %p101
    %p103 = scmp.ne.s32.totalorder %s89, %s90
    %p104 = scmp.eq.s32.totalorder %s14, 1
    %p105 = por %p103, %p104
    %p107 = scmp.ne.s32.totalorder %s90, %s106
    %p108 = scmp.eq.s32.totalorder %s14, 0
    %p109 = por %p107, %p108
    %p110 = scmp.le.s32.totalorder 1, %s8
    %p111 = scmp.lt.s32.totalorder %s8, 3
    %p112 = pnand %p110, %p111
    %p113 = pneg %p112
    // Predicated region
    $region9: #{tpu_custom_call.1} parent=5 // pred_check
      _
    $region10: #{tpu_custom_call.1} parent=5 // pred_check_branch
      %115 = sbr.rel (%p112) target = $region12
    $region11: #{tpu_custom_call.1} parent=5 // pred_region
      %s116 = ssub.s32 %s8, 1
    $region12: #{tpu_custom_call.1} parent=5 // pred_fallthru
      _
    %p117 = scmp.lt.s32.totalorder %s8, 2
    // Predicated region
    $region13: #{tpu_custom_call.1} parent=5 // pred_check
      %p118 = pneg %p117
    $region14: #{tpu_custom_call.1} parent=5 // pred_check_branch
      %120 = sbr.rel (%p118) target = $region16
    $region15: #{tpu_custom_call.1} parent=5 // pred_region
      // Predicated region
      $region17: #{tpu_custom_call.1} parent=15 // pred_check
        %p121 = pneg %p42
      $region18: #{tpu_custom_call.1} parent=15 // pred_check_branch
        %123 = sbr.rel (%p121) target = $region20
      $region19: #{tpu_custom_call.1} parent=15 // pred_region
        %s124 = smul.u32 32, %s16
        %p125 = scmp.lt.s32.totalorder %s15, 1
        %s126 = scalar_select %p125, %s15, 1
        %p127 = scmp.lt.s32.totalorder %s124, 31
        %s128 = scalar_select %p127, %s124, 31
        %s129 = smul.addr %s126, 32
        %s130 = sadd.s32 %s128, %s129
        %s131 = smul.addr %s130, 4
        %s132 = scalar_lea.vmem %s0, %s131
        %s133 = smul.u32 32, %s16
      $region20: #{tpu_custom_call.1} parent=15 // pred_fallthru
        _
      // Predicated region
      $region21: #{tpu_custom_call.1} parent=15 // pred_check
        %p134 = pneg %p68
      $region22: #{tpu_custom_call.1} parent=15 // pred_check_branch
        %136 = sbr.rel (%p134) target = $region24
      $region23: #{tpu_custom_call.1} parent=15 // pred_region
        %p137 = scmp.lt.s32.totalorder %s15, 1
        %s138 = scalar_select %p137, %s15, 1
        %s139 = smul.addr %s138, 4
        %s140 = smul.addr %s139, 4
        %s141 = scalar_lea.vmem %s1, %s140
      $region24: #{tpu_custom_call.1} parent=15 // pred_fallthru
        _
    $region16: #{tpu_custom_call.1} parent=5 // pred_fallthru
      _
    %p142 = scmp.le.s32.totalorder 1, %s8
    %p143 = scmp.lt.s32.totalorder %s8, 3
    %p144 = pnand %p142, %p143
    %p145 = pneg %p144
    // Predicated region
    $region25: #{tpu_custom_call.1} parent=5 // pred_check
      _
    $region26: #{tpu_custom_call.1} parent=5 // pred_check_branch
      %147 = sbr.rel (%p144) target = $region28
    $region27: #{tpu_custom_call.1} parent=5 // pred_region
      %s148 = ssub.s32 %s8, 1
      %s149 = smul.u32 32, %s18
      %p150 = scmp.lt.s32.totalorder %s17, 1
      %s151 = scalar_select %p150, %s17, 1
      %p152 = scmp.lt.s32.totalorder %s149, 31
      %s153 = scalar_select %p152, %s149, 31
      %s154 = smul.addr %s151, 32
      %s155 = sadd.s32 %s153, %s154
      %s156 = smul.addr %s155, 4
      %s157 = scalar_lea.vmem %s0, %s156
      %p158 = pneg %p48
      %p159 = pneg %p45
      %p160 = scmp.lt.s32.totalorder %s17, 1
      %s161 = scalar_select %p160, %s17, 1
      %s162 = smul.addr %s161, 4
      %s163 = smul.addr %s162, 4
      %s164 = scalar_lea.vmem %s1, %s163
      %p165 = pneg %p74
      %p166 = pneg %p71
      %p167 = pneg %p102
      %p168 = pneg %p99
      %s169 = smul.u32 32, %s18
      %p170 = scmp.lt.s32.totalorder %s17, 1
      %s171 = scalar_select %p170, %s17, 1
      %p172 = scmp.lt.s32.totalorder %s169, 31
      %s173 = scalar_select %p172, %s169, 31
      %s174 = smul.addr %s171, 32
      %s175 = sadd.s32 %s173, %s174
      %s176 = smul.addr %s175, 4
      %s177 = scalar_lea.vmem %s2, %s176
      %s178 = smul.u32 32, %s18
      %p179 = scmp.lt.s32.totalorder %s17, 1
      %s180 = scalar_select %p179, %s17, 1
      %p181 = scmp.lt.s32.totalorder %s178, 31
      %s182 = scalar_select %p181, %s178, 31
      %s183 = smul.addr %s180, 32
      %s184 = sadd.s32 %s182, %s183
      %s185 = smul.addr %s184, 4
      %s186 = scalar_lea.vmem %s0, %s185
      %s187 = smul.u32 32, %s18
      %p188 = scmp.lt.s32.totalorder %s17, 1
      %s189 = scalar_select %p188, %s17, 1
      %s190 = smul.addr %s189, 4
      %s191 = smul.addr %s190, 4
      %s192 = scalar_lea.vmem %s1, %s191
      %s193 = smul.u32 32, %s18
      %p194 = scmp.lt.s32.totalorder %s17, 1
      %s195 = scalar_select %p194, %s17, 1
      %p196 = scmp.lt.s32.totalorder %s193, 31
      %s197 = scalar_select %p196, %s193, 31
      %s198 = smul.addr %s195, 32
      %s199 = sadd.s32 %s197, %s198
      %s200 = smul.addr %s199, 4
      %s201 = scalar_lea.vmem %s2, %s200
      %s202 = smul.u32 32, %s18
      %v204 = vld [vmem:[%s186] sm:$0xf]
      %v205 = vld [vmem:[%s186 + $0x4] sm:$0xf]
      %v206 = vld [vmem:[%s186 + $0x8] sm:$0xf]
      %v207 = vld [vmem:[%s186 + $0xc] sm:$0xf]
      %v208 = vld [vmem:[%s186 + $0x10] sm:$0xf]
      %v209 = vld [vmem:[%s186 + $0x14] sm:$0xf]
      %v210 = vld [vmem:[%s186 + $0x18] sm:$0xf]
      %v211 = vld [vmem:[%s186 + $0x1c] sm:$0xf]
      %v212 = vld [vmem:[%s186 + $0x20] sm:$0xf]
      %v213 = vld [vmem:[%s186 + $0x24] sm:$0xf]
      %v214 = vld [vmem:[%s186 + $0x28] sm:$0xf]
      %v215 = vld [vmem:[%s186 + $0x2c] sm:$0xf]
      %v216 = vld [vmem:[%s186 + $0x30] sm:$0xf]
      %v217 = vld [vmem:[%s186 + $0x34] sm:$0xf]
      %v218 = vld [vmem:[%s186 + $0x38] sm:$0xf]
      %v219 = vld [vmem:[%s186 + $0x3c] sm:$0xf]
      %v220 = vld [vmem:[%s186 + $0x40] sm:$0xf]
      %v221 = vld [vmem:[%s186 + $0x44] sm:$0xf]
      %v222 = vld [vmem:[%s186 + $0x48] sm:$0xf]
      %v223 = vld [vmem:[%s186 + $0x4c] sm:$0xf]
      %v224 = vld [vmem:[%s186 + $0x50] sm:$0xf]
      %v225 = vld [vmem:[%s186 + $0x54] sm:$0xf]
      %v226 = vld [vmem:[%s186 + $0x58] sm:$0xf]
      %v227 = vld [vmem:[%s186 + $0x5c] sm:$0xf]
      %v228 = vld [vmem:[%s186 + $0x60] sm:$0xf]
      %v229 = vld [vmem:[%s186 + $0x64] sm:$0xf]
      %v230 = vld [vmem:[%s186 + $0x68] sm:$0xf]
      %v231 = vld [vmem:[%s186 + $0x6c] sm:$0xf]
      %v232 = vld [vmem:[%s186 + $0x70] sm:$0xf]
      %v233 = vld [vmem:[%s186 + $0x74] sm:$0xf]
      %v234 = vld [vmem:[%s186 + $0x78] sm:$0xf]
      %v235 = vld [vmem:[%s186 + $0x7c] sm:$0xf]
      %v236 = vld [vmem:[%s192] sm:$0xf]
      %v237 = vld [vmem:[%s192 + $0x4] sm:$0xf]
      %v238 = vld [vmem:[%s192 + $0x8] sm:$0xf]
      %v239 = vld [vmem:[%s192 + $0xc] sm:$0x3]
      %v272 = vunpack.c.l.b16 %v204
      %v273 = vunpack.c.l.b16 %v205
      %v274 = vunpack.c.l.b16 %v206
      %v275 = vunpack.c.l.b16 %v207
      %v276 = vunpack.c.l.b16 %v208
      %v277 = vunpack.c.l.b16 %v209
      %v278 = vunpack.c.l.b16 %v210
      %v279 = vunpack.c.l.b16 %v211
      %v280 = vunpack.c.l.b16 %v212
      %v281 = vunpack.c.l.b16 %v213
      %v282 = vunpack.c.l.b16 %v214
      %v283 = vunpack.c.l.b16 %v215
      %v284 = vunpack.c.l.b16 %v216
      %v285 = vunpack.c.l.b16 %v217
      %v286 = vunpack.c.l.b16 %v218
      %v287 = vunpack.c.l.b16 %v219
      %v288 = vunpack.c.l.b16 %v220
      %v289 = vunpack.c.l.b16 %v221
      %v290 = vunpack.c.l.b16 %v222
      %v291 = vunpack.c.l.b16 %v223
      %v292 = vunpack.c.l.b16 %v224
      %v293 = vunpack.c.l.b16 %v225
      %v294 = vunpack.c.l.b16 %v226
      %v295 = vunpack.c.l.b16 %v227
      %v296 = vunpack.c.l.b16 %v228
      %v297 = vunpack.c.l.b16 %v229
      %v298 = vunpack.c.l.b16 %v230
      %v299 = vunpack.c.l.b16 %v231
      %v300 = vunpack.c.l.b16 %v232
      %v301 = vunpack.c.l.b16 %v233
      %v302 = vunpack.c.l.b16 %v234
      %v303 = vunpack.c.l.b16 %v235
      %v304 = vpack.c.b16 %v273, %v272
      %v305 = vpack.c.b16 %v275, %v274
      %v306 = vpack.c.b16 %v277, %v276
      %v307 = vpack.c.b16 %v279, %v278
      %v308 = vpack.c.b16 %v281, %v280
      %v309 = vpack.c.b16 %v283, %v282
      %v310 = vpack.c.b16 %v285, %v284
      %v311 = vpack.c.b16 %v287, %v286
      %v312 = vpack.c.b16 %v289, %v288
      %v313 = vpack.c.b16 %v291, %v290
      %v314 = vpack.c.b16 %v293, %v292
      %v315 = vpack.c.b16 %v295, %v294
      %v316 = vpack.c.b16 %v297, %v296
      %v317 = vpack.c.b16 %v299, %v298
      %v318 = vpack.c.b16 %v301, %v300
      %v319 = vpack.c.b16 %v303, %v302
      %v324 = vunpack.c.l.b16 %v236
      %v325 = vunpack.c.l.b16 %v237
      %v326 = vunpack.c.l.b16 %v238
      %v327 = vunpack.c.l.b16 %v239
      %v328 = vpack.c.b16 %v325, %v324
      %v329 = vpack.c.b16 %v327, %v326
      %vm331 = vcmask 220160
      %v333 = vsel %vm331, %v304, 0
      %v336 = vsel %vm331, %v305, 0
      %v339 = vsel %vm331, %v306, 0
      %v342 = vsel %vm331, %v307, 0
      %v345 = vsel %vm331, %v308, 0
      %v348 = vsel %vm331, %v309, 0
      %v351 = vsel %vm331, %v310, 0
      %v354 = vsel %vm331, %v311, 0
      %v357 = vsel %vm331, %v312, 0
      %v360 = vsel %vm331, %v313, 0
      %v363 = vsel %vm331, %v314, 0
      %v366 = vsel %vm331, %v315, 0
      %v369 = vsel %vm331, %v316, 0
      %v372 = vsel %vm331, %v317, 0
      %v375 = vsel %vm331, %v318, 0
      %v378 = vsel %vm331, %v319, 0
      %vm380 = vcmask 1044480
      %vm381 = vcmask 1045504
      %v382 = vsel %vm380, 4294967295, 65535
      %v383 = vsel %vm381, %v382, 0
      %v385 = vand.u32 %v329, %v383
      %387 = vmatprep.subr.bf16.mxu0 0
      %388 = vmatpush1.bf16.msra.mxu0 %v328
      %389 = vmatprep.subr.bf16.mxu0 0
      %390 = vmatpush1.bf16.msra.mxu0 %v385
      %391 = vmatprep.subr.bf16.mxu0 0
      %392 = vmatpush1.bf16.msra.mxu0 0
      %393 = vmatprep.subr.bf16.mxu0 0
      %394 = vmatpush1.bf16.msra.mxu0 0
      %395 = vmatprep.subr.bf16.mxu0 0
      %396 = vmatpush1.bf16.msra.mxu0 0
      %397 = vmatprep.subr.bf16.mxu0 0
      %398 = vmatpush1.bf16.msra.mxu0 0
      %399 = vmatprep.subr.bf16.mxu0 0
      %400 = vmatpush1.bf16.msra.mxu0 0
      %401 = vmatprep.subr.bf16.mxu0 0
      %402 = vmatpush1.bf16.msra.mxu0 0
      %403 = vmatprep.subr.bf16.mxu0 0
      %404 = vmatpush1.bf16.msra.mxu0 0
      %405 = vmatprep.subr.bf16.mxu0 0
      %406 = vmatpush1.bf16.msra.mxu0 0
      %407 = vmatprep.subr.bf16.mxu0 0
      %408 = vmatpush1.bf16.msra.mxu0 0
      %409 = vmatprep.subr.bf16.mxu0 0
      %410 = vmatpush1.bf16.msra.mxu0 0
      %411 = vmatprep.subr.bf16.mxu0 0
      %412 = vmatpush1.bf16.msra.mxu0 0
      %413 = vmatprep.subr.bf16.mxu0 0
      %414 = vmatpush1.bf16.msra.mxu0 0
      %415 = vmatprep.subr.bf16.mxu0 0
      %416 = vmatpush1.bf16.msra.mxu0 0
      %417 = vmatprep.subr.bf16.mxu0 0
      %418 = vmatpush1.bf16.msra.mxu0 0
      %419 = vmatprep.mubr.bf16.mxu0 0
      %420 = vmatmul.mubr.bf16.gmra.mrb[0].mxu0 %v333
      %v421 = vpop.f32.mrb[0].mxu0
      %v422 = vadd.f32 0.0, %v421
      %v423 = vpop.f32.mrb[0].mxu0
      %v424 = vpop.f32.mrb[0].mxu0
      %v425 = vadd.f32 0.0, %v424
      %v426 = vpop.f32.mrb[0].mxu0
      %427 = vmatprep.mubr.bf16.mxu0 0
      %428 = vmatmul.mubr.bf16.gmra.mrb[0].mxu0 %v336
      %v429 = vpop.f32.mrb[0].mxu0
      %v430 = vadd.f32 0.0, %v429
      %v431 = vpop.f32.mrb[0].mxu0
      %v432 = vpop.f32.mrb[0].mxu0
      %v433 = vadd.f32 0.0, %v432
      %v434 = vpop.f32.mrb[0].mxu0
      %435 = vmatprep.mubr.bf16.mxu0 0
      %436 = vmatmul.mubr.bf16.gmra.mrb[0].mxu0 %v339
      %v437 = vpop.f32.mrb[0].mxu0
      %v438 = vadd.f32 0.0, %v437
      %v439 = vpop.f32.mrb[0].mxu0
      %v440 = vpop.f32.mrb[0].mxu0
      %v441 = vadd.f32 0.0, %v440
      %v442 = vpop.f32.mrb[0].mxu0
      %443 = vmatprep.mubr.bf16.mxu0 0
      %444 = vmatmul.mubr.bf16.gmra.mrb[0].mxu0 %v342
      %v445 = vpop.f32.mrb[0].mxu0
      %v446 = vadd.f32 0.0, %v445
      %v447 = vpop.f32.mrb[0].mxu0
      %v448 = vpop.f32.mrb[0].mxu0
      %v449 = vadd.f32 0.0, %v448
      %v450 = vpop.f32.mrb[0].mxu0
      %451 = vmatprep.mubr.bf16.mxu0 0
      %452 = vmatmul.mubr.bf16.gmra.mrb[0].mxu0 %v345
      %v453 = vpop.f32.mrb[0].mxu0
      %v454 = vadd.f32 0.0, %v453
      %v455 = vpop.f32.mrb[0].mxu0
      %v456 = vpop.f32.mrb[0].mxu0
      %v457 = vadd.f32 0.0, %v456
      %v458 = vpop.f32.mrb[0].mxu0
      %459 = vmatprep.mubr.bf16.mxu0 0
      %460 = vmatmul.mubr.bf16.gmra.mrb[0].mxu0 %v348
      %v461 = vpop.f32.mrb[0].mxu0
      %v462 = vadd.f32 0.0, %v461
      %v463 = vpop.f32.mrb[0].mxu0
      %v464 = vpop.f32.mrb[0].mxu0
      %v465 = vadd.f32 0.0, %v464
      %v466 = vpop.f32.mrb[0].mxu0
      %467 = vmatprep.mubr.bf16.mxu0 0
      %468 = vmatmul.mubr.bf16.gmra.mrb[0].mxu0 %v351
      %v469 = vpop.f32.mrb[0].mxu0
      %v470 = vadd.f32 0.0, %v469
      %v471 = vpop.f32.mrb[0].mxu0
      %v472 = vpop.f32.mrb[0].mxu0
      %v473 = vadd.f32 0.0, %v472
      %v474 = vpop.f32.mrb[0].mxu0
      %475 = vmatprep.mubr.bf16.mxu0 0
      %476 = vmatmul.mubr.bf16.gmra.mrb[0].mxu0 %v354
      %v477 = vpop.f32.mrb[0].mxu0
      %v478 = vadd.f32 0.0, %v477
      %v479 = vpop.f32.mrb[0].mxu0
      %v480 = vpop.f32.mrb[0].mxu0
      %v481 = vadd.f32 0.0, %v480
      %v482 = vpop.f32.mrb[0].mxu0
      %483 = vmatprep.mubr.bf16.mxu0 0
      %484 = vmatmul.mubr.bf16.gmra.mrb[0].mxu0 %v357
      %v485 = vpop.f32.mrb[0].mxu0
      %v486 = vadd.f32 0.0, %v485
      %v487 = vpop.f32.mrb[0].mxu0
      %v488 = vpop.f32.mrb[0].mxu0
      %v489 = vadd.f32 0.0, %v488
      %v490 = vpop.f32.mrb[0].mxu0
      %491 = vmatprep.mubr.bf16.mxu0 0
      %492 = vmatmul.mubr.bf16.gmra.mrb[0].mxu0 %v360
      %v493 = vpop.f32.mrb[0].mxu0
      %v494 = vadd.f32 0.0, %v493
      %v495 = vpop.f32.mrb[0].mxu0
      %v496 = vpop.f32.mrb[0].mxu0
      %v497 = vadd.f32 0.0, %v496
      %v498 = vpop.f32.mrb[0].mxu0
      %499 = vmatprep.mubr.bf16.mxu0 0
      %500 = vmatmul.mubr.bf16.gmra.mrb[0].mxu0 %v363
      %v501 = vpop.f32.mrb[0].mxu0
      %v502 = vadd.f32 0.0, %v501
      %v503 = vpop.f32.mrb[0].mxu0
      %v504 = vpop.f32.mrb[0].mxu0
      %v505 = vadd.f32 0.0, %v504
      %v506 = vpop.f32.mrb[0].mxu0
      %507 = vmatprep.mubr.bf16.mxu0 0
      %508 = vmatmul.mubr.bf16.gmra.mrb[0].mxu0 %v366
      %v509 = vpop.f32.mrb[0].mxu0
      %v510 = vadd.f32 0.0, %v509
      %v511 = vpop.f32.mrb[0].mxu0
      %v512 = vpop.f32.mrb[0].mxu0
      %v513 = vadd.f32 0.0, %v512
      %v514 = vpop.f32.mrb[0].mxu0
      %515 = vmatprep.mubr.bf16.mxu0 0
      %516 = vmatmul.mubr.bf16.gmra.mrb[0].mxu0 %v369
      %v517 = vpop.f32.mrb[0].mxu0
      %v518 = vadd.f32 0.0, %v517
      %v519 = vpop.f32.mrb[0].mxu0
      %v520 = vpop.f32.mrb[0].mxu0
      %v521 = vadd.f32 0.0, %v520
      %v522 = vpop.f32.mrb[0].mxu0
      %523 = vmatprep.mubr.bf16.mxu0 0
      %524 = vmatmul.mubr.bf16.gmra.mrb[0].mxu0 %v372
      %v525 = vpop.f32.mrb[0].mxu0
      %v526 = vadd.f32 0.0, %v525
      %v527 = vpop.f32.mrb[0].mxu0
      %v528 = vpop.f32.mrb[0].mxu0
      %v529 = vadd.f32 0.0, %v528
      %v530 = vpop.f32.mrb[0].mxu0
      %531 = vmatprep.mubr.bf16.mxu0 0
      %532 = vmatmul.mubr.bf16.gmra.mrb[0].mxu0 %v375
      %v533 = vpop.f32.mrb[0].mxu0
      %v534 = vadd.f32 0.0, %v533
      %v535 = vpop.f32.mrb[0].mxu0
      %v536 = vpop.f32.mrb[0].mxu0
      %v537 = vadd.f32 0.0, %v536
      %v538 = vpop.f32.mrb[0].mxu0
      %539 = vmatprep.mubr.bf16.mxu0 0
      %540 = vmatmul.mubr.bf16.gmra.mrb[0].mxu0 %v378
      %v541 = vpop.f32.mrb[0].mxu0
      %v542 = vadd.f32 0.0, %v541
      %v543 = vpop.f32.mrb[0].mxu0
      %v544 = vpop.f32.mrb[0].mxu0
      %v545 = vadd.f32 0.0, %v544
      %v546 = vpop.f32.mrb[0].mxu0
      %547 = vdwg.mxu0
      %v548 = vpack.c.bf16 %v425, %v422
      %v549 = vpack.c.bf16 %v433, %v430
      %v550 = vpack.c.bf16 %v441, %v438
      %v551 = vpack.c.bf16 %v449, %v446
      %v552 = vpack.c.bf16 %v457, %v454
      %v553 = vpack.c.bf16 %v465, %v462
      %v554 = vpack.c.bf16 %v473, %v470
      %v555 = vpack.c.bf16 %v481, %v478
      %v556 = vpack.c.bf16 %v489, %v486
      %v557 = vpack.c.bf16 %v497, %v494
      %v558 = vpack.c.bf16 %v505, %v502
      %v559 = vpack.c.bf16 %v513, %v510
      %v560 = vpack.c.bf16 %v521, %v518
      %v561 = vpack.c.bf16 %v529, %v526
      %v562 = vpack.c.bf16 %v537, %v534
      %v563 = vpack.c.bf16 %v545, %v542
      %v580 = vunpack.c.l.b16 %v548
      %v581 = vunpack.c.h.b16 %v548
      %v582 = vunpack.c.l.b16 %v549
      %v583 = vunpack.c.h.b16 %v549
      %v584 = vunpack.c.l.b16 %v550
      %v585 = vunpack.c.h.b16 %v550
      %v586 = vunpack.c.l.b16 %v551
      %v587 = vunpack.c.h.b16 %v551
      %v588 = vunpack.c.l.b16 %v552
      %v589 = vunpack.c.h.b16 %v552
      %v590 = vunpack.c.l.b16 %v553
      %v591 = vunpack.c.h.b16 %v553
      %v592 = vunpack.c.l.b16 %v554
      %v593 = vunpack.c.h.b16 %v554
      %v594 = vunpack.c.l.b16 %v555
      %v595 = vunpack.c.h.b16 %v555
      %v596 = vunpack.c.l.b16 %v556
      %v597 = vunpack.c.h.b16 %v556
      %v598 = vunpack.c.l.b16 %v557
      %v599 = vunpack.c.h.b16 %v557
      %v600 = vunpack.c.l.b16 %v558
      %v601 = vunpack.c.h.b16 %v558
      %v602 = vunpack.c.l.b16 %v559
      %v603 = vunpack.c.h.b16 %v559
      %v604 = vunpack.c.l.b16 %v560
      %v605 = vunpack.c.h.b16 %v560
      %v606 = vunpack.c.l.b16 %v561
      %v607 = vunpack.c.h.b16 %v561
      %v608 = vunpack.c.l.b16 %v562
      %v609 = vunpack.c.h.b16 %v562
      %v610 = vunpack.c.l.b16 %v563
      %v611 = vunpack.c.h.b16 %v563
      %v612 = vpack.c.b16 %v580, %v580
      %v613 = vpack.c.b16 %v581, %v581
      %v614 = vpack.c.b16 %v582, %v582
      %v615 = vpack.c.b16 %v583, %v583
      %v616 = vpack.c.b16 %v584, %v584
      %v617 = vpack.c.b16 %v585, %v585
      %v618 = vpack.c.b16 %v586, %v586
      %v619 = vpack.c.b16 %v587, %v587
      %v620 = vpack.c.b16 %v588, %v588
      %v621 = vpack.c.b16 %v589, %v589
      %v622 = vpack.c.b16 %v590, %v590
      %v623 = vpack.c.b16 %v591, %v591
      %v624 = vpack.c.b16 %v592, %v592
      %v625 = vpack.c.b16 %v593, %v593
      %v626 = vpack.c.b16 %v594, %v594
      %v627 = vpack.c.b16 %v595, %v595
      %v628 = vpack.c.b16 %v596, %v596
      %v629 = vpack.c.b16 %v597, %v597
      %v630 = vpack.c.b16 %v598, %v598
      %v631 = vpack.c.b16 %v599, %v599
      %v632 = vpack.c.b16 %v600, %v600
      %v633 = vpack.c.b16 %v601, %v601
      %v634 = vpack.c.b16 %v602, %v602
      %v635 = vpack.c.b16 %v603, %v603
      %v636 = vpack.c.b16 %v604, %v604
      %v637 = vpack.c.b16 %v605, %v605
      %v638 = vpack.c.b16 %v606, %v606
      %v639 = vpack.c.b16 %v607, %v607
      %v640 = vpack.c.b16 %v608, %v608
      %v641 = vpack.c.b16 %v609, %v609
      %v642 = vpack.c.b16 %v610, %v610
      %v643 = vpack.c.b16 %v611, %v611
      %vm676 = vcmask 519168
      %677 = vst.msk [vmem:[%s201] sm:$0xf] %vm676, %v612
      %678 = vst.msk [vmem:[%s201 + $0x4] sm:$0xf] %vm676, %v613
      %679 = vst.msk [vmem:[%s201 + $0x8] sm:$0xf] %vm676, %v614
      %680 = vst.msk [vmem:[%s201 + $0xc] sm:$0xf] %vm676, %v615
      %681 = vst.msk [vmem:[%s201 + $0x10] sm:$0xf] %vm676, %v616
      %682 = vst.msk [vmem:[%s201 + $0x14] sm:$0xf] %vm676, %v617
      %683 = vst.msk [vmem:[%s201 + $0x18] sm:$0xf] %vm676, %v618
      %684 = vst.msk [vmem:[%s201 + $0x1c] sm:$0xf] %vm676, %v619
      %685 = vst.msk [vmem:[%s201 + $0x20] sm:$0xf] %vm676, %v620
      %686 = vst.msk [vmem:[%s201 + $0x24] sm:$0xf] %vm676, %v621
      %687 = vst.msk [vmem:[%s201 + $0x28] sm:$0xf] %vm676, %v622
      %688 = vst.msk [vmem:[%s201 + $0x2c] sm:$0xf] %vm676, %v623
      %689 = vst.msk [vmem:[%s201 + $0x30] sm:$0xf] %vm676, %v624
      %690 = vst.msk [vmem:[%s201 + $0x34] sm:$0xf] %vm676, %v625
      %691 = vst.msk [vmem:[%s201 + $0x38] sm:$0xf] %vm676, %v626
      %692 = vst.msk [vmem:[%s201 + $0x3c] sm:$0xf] %vm676, %v627
      %693 = vst.msk [vmem:[%s201 + $0x40] sm:$0xf] %vm676, %v628
      %694 = vst.msk [vmem:[%s201 + $0x44] sm:$0xf] %vm676, %v629
      %695 = vst.msk [vmem:[%s201 + $0x48] sm:$0xf] %vm676, %v630
      %696 = vst.msk [vmem:[%s201 + $0x4c] sm:$0xf] %vm676, %v631
      %697 = vst.msk [vmem:[%s201 + $0x50] sm:$0xf] %vm676, %v632
      %698 = vst.msk [vmem:[%s201 + $0x54] sm:$0xf] %vm676, %v633
      %699 = vst.msk [vmem:[%s201 + $0x58] sm:$0xf] %vm676, %v634
      %700 = vst.msk [vmem:[%s201 + $0x5c] sm:$0xf] %vm676, %v635
      %701 = vst.msk [vmem:[%s201 + $0x60] sm:$0xf] %vm676, %v636
      %702 = vst.msk [vmem:[%s201 + $0x64] sm:$0xf] %vm676, %v637
      %703 = vst.msk [vmem:[%s201 + $0x68] sm:$0xf] %vm676, %v638
      %704 = vst.msk [vmem:[%s201 + $0x6c] sm:$0xf] %vm676, %v639
      %705 = vst.msk [vmem:[%s201 + $0x70] sm:$0xf] %vm676, %v640
      %706 = vst.msk [vmem:[%s201 + $0x74] sm:$0xf] %vm676, %v641
      %707 = vst.msk [vmem:[%s201 + $0x78] sm:$0xf] %vm676, %v642
      %708 = vst.msk [vmem:[%s201 + $0x7c] sm:$0xf] %vm676, %v643
      %s709 = smul.u32 32, %s18
      %p710 = scmp.lt.s32.totalorder %s17, 1
      %s711 = scalar_select %p710, %s17, 1
      %p712 = scmp.lt.s32.totalorder %s709, 31
      %s713 = scalar_select %p712, %s709, 31
      %s714 = smul.addr %s711, 32
      %s715 = sadd.s32 %s713, %s714
      %s716 = smul.addr %s715, 4
      %s717 = scalar_lea.vmem %s2, %s716
      // Predicated region
      $region29: #{tpu_custom_call.1} parent=27 // pred_check
        %p718 = pneg %p99
      $region30: #{tpu_custom_call.1} parent=27 // pred_check_branch
        %720 = sbr.rel (%p718) target = $region32
      $region31: #{tpu_custom_call.1} parent=27 // pred_region
        %s721 = smul.u32 32, %s18
      $region32: #{tpu_custom_call.1} parent=27 // pred_fallthru
        _
    $region28: #{tpu_custom_call.1} parent=5 // pred_fallthru
      _
    %p722 = scmp.le.s32.totalorder 2, %s8
    // Predicated region
    $region33: #{tpu_custom_call.1} parent=5 // pred_check
      %p723 = pneg %p722
    $region34: #{tpu_custom_call.1} parent=5 // pred_check_branch
      %725 = sbr.rel (%p723) target = $region36
    $region35: #{tpu_custom_call.1} parent=5 // pred_region
      %s726 = ssub.s32 %s8, 2
      // Predicated region
      $region37: #{tpu_custom_call.1} parent=35 // pred_check
        %p727 = pneg %p105
      $region38: #{tpu_custom_call.1} parent=35 // pred_check_branch
        %729 = sbr.rel (%p727) target = $region40
      $region39: #{tpu_custom_call.1} parent=35 // pred_region
        %s730 = smul.u32 32, %s20
        %p731 = scmp.lt.s32.totalorder %s19, 1
        %s732 = scalar_select %p731, %s19, 1
        %p733 = scmp.lt.s32.totalorder %s730, 31
        %s734 = scalar_select %p733, %s730, 31
        %s735 = smul.addr %s732, 32
        %s736 = sadd.s32 %s734, %s735
        %s737 = smul.addr %s736, 4
        %s738 = scalar_lea.vmem %s2, %s737
      $region40: #{tpu_custom_call.1} parent=35 // pred_fallthru
        _
    $region36: #{tpu_custom_call.1} parent=5 // pred_fallthru
      _
  $region6: #{tpu_custom_call.1} parent=0 // loop_footer
    %s12 = sadd.s32 1, %s8
  $region7: #{tpu_custom_call.1} parent=0 // loop_footer_branch
    %7 = sbr.rel target = $region3
  $region8: #{tpu_custom_call.1} parent=0 // loop_exit
    _

</llo_original>
